<compile_context>
chip_gen: v7x
topology: tpu7x:2x2x1
jax: 0.10.0
libtpu: 0.0.40
codegen_flags: <defaults>
</compile_context>

<pallas_src>
import jax
import jax.numpy as jnp
from jax.experimental import pallas as pl
from jax.experimental.pallas import tpu as pltpu


def _aspp_pooling_kernel(x_ref, w_ref, scale_ref, bias_ref, o_ref, acc_ref):
    # x_ref:     (N, C_in, TILE_S)   model dtype   (spatial tile of the input)
    # w_ref:     (C_in, C_out)       f32           (1x1 conv weight, transposed)
    # scale_ref: (1, C_out)          f32           (gamma / sqrt(var+eps) / (H*W))
    # bias_ref:  (1, C_out)          f32           (beta - mean * gamma / sqrt(var+eps))
    # o_ref:     (N, C_out)          f32           (pooled -> conv -> BN -> ReLU result)
    # acc_ref:   (N, C_in, TILE_S)   f32 scratch   (element-wise running spatial sum)
    s = pl.program_id(0)

    @pl.when(s == 0)
    def _init():
        acc_ref[...] = jnp.zeros_like(acc_ref)

    # Pure VALU element-wise accumulation; pipelines cleanly with the streaming DMA.
    acc_ref[...] += x_ref[...].astype(jnp.float32)

    @pl.when(s == pl.num_programs(0) - 1)
    def _finalize():
        pooled_sum = jnp.sum(acc_ref[...], axis=-1)            # (N, C_in) single XLU reduce
        y = jnp.dot(pooled_sum, w_ref[...],
                    preferred_element_type=jnp.float32)        # (N, C_out) 1x1 conv (MXU, once)
        y = y * scale_ref[...] + bias_ref[...]                 # BN (mean div folded into scale)
        o_ref[...] = jnp.maximum(y, 0.0).astype(o_ref.dtype)   # ReLU


def _pick_spatial_tile(N, C_in, HW, itemsize):
    """Lane-dense spatial tile (multiple of 128) sized so that the double-buffered
    input tile plus the f32 accumulator scratch stay well under scoped VMEM on
    v5e/v6e/v7x (~8 MiB budget)."""
    budget = 8 * 1024 * 1024
    per_lane_bytes = N * C_in * (2 * itemsize + 4)   # 2 input buffers + f32 scratch
    tile = (budget // max(per_lane_bytes, 1)) // 128 * 128
    tile = max(128, min(tile, 2048))                 # clamp to a sane streaming size
    hw_rounded = max(128, pl.cdiv(HW, 128) * 128)
    return min(tile, hw_rounded)


def aspp_pooling_forward(x, conv_w, bn_gamma, bn_beta, bn_mean, bn_var, eps=1e-5):
    """x: (N, C_in, H, W) NCHW (any float dtype). conv_w: (C_out, C_in, 1, 1).
    Returns (N, C_out, H, W) in x.dtype."""
    N, C_in, H, W = x.shape
    C_out = conv_w.shape[0]
    HW = H * W

    # Keep the model dtype for the streamed input (no f32 upcast in HBM).
    x_flat = x.reshape(N, C_in, HW)

    tile = _pick_spatial_tile(N, C_in, HW, x.dtype.itemsize)
    hw_pad = pl.cdiv(HW, tile) * tile
    if hw_pad != HW:
        # Zero padding is exact: we accumulate a SUM and divide by the true H*W.
        x_flat = jnp.pad(x_flat, ((0, 0), (0, 0), (0, hw_pad - HW)))
    num_tiles = hw_pad // tile

    # Fold BN (inference) and the 1/(H*W) mean divisor into a single scale/bias pair.
    w = conv_w.reshape(C_out, C_in).T.astype(jnp.float32)                 # (C_in, C_out)
    bn_scale = (bn_gamma / jnp.sqrt(bn_var + eps)).astype(jnp.float32)    # (C_out,)
    bias = (bn_beta.astype(jnp.float32) - bn_mean.astype(jnp.float32) * bn_scale)
    scale = (bn_scale / float(HW)).reshape(1, C_out)                      # mean divisor folded in
    bias = bias.reshape(1, C_out)

    y = pl.pallas_call(
        _aspp_pooling_kernel,
        out_shape=jax.ShapeDtypeStruct((N, C_out), jnp.float32),
        grid_spec=pltpu.PrefetchScalarGridSpec(
            num_scalar_prefetch=0,
            grid=(num_tiles,),
            in_specs=[
                pl.BlockSpec((N, C_in, tile), lambda s: (0, 0, s)),   # streamed spatial tiles
                pl.BlockSpec((C_in, C_out), lambda s: (0, 0)),        # resident weight
                pl.BlockSpec((1, C_out), lambda s: (0, 0)),           # resident BN scale
                pl.BlockSpec((1, C_out), lambda s: (0, 0)),           # resident BN bias
            ],
            out_specs=pl.BlockSpec((N, C_out), lambda s: (0, 0)),     # written once, at the end
            scratch_shapes=[pltpu.VMEM((N, C_in, tile), jnp.float32)],
        ),
        compiler_params=pltpu.CompilerParams(
            dimension_semantics=("arbitrary",),   # spatial axis is a reduction
        ),
    )(x_flat, w, scale, bias)

    # Bilinear upsample from a 1x1 source with align_corners=True == broadcast.
    # Done in XLA so it can fuse into the ASPP concat consumer (no kernel store traffic).
    y = y.astype(x.dtype)
    return jnp.broadcast_to(y[:, :, None, None], (N, C_out, H, W))


def _reference(x, conv_w, bn_gamma, bn_beta, bn_mean, bn_var, eps=1e-5):
    # Pure-JAX reference mirroring the PyTorch forward (BN in inference mode).
    N, C_in, H, W = x.shape
    C_out = conv_w.shape[0]
    pooled = jnp.mean(x.astype(jnp.float32), axis=(2, 3))           # (N, C_in)
    y = pooled @ conv_w.reshape(C_out, C_in).T.astype(jnp.float32)  # (N, C_out)
    y = (y - bn_mean) / jnp.sqrt(bn_var + eps) * bn_gamma + bn_beta
    y = jnp.maximum(y, 0.0)
    return jnp.broadcast_to(y[:, :, None, None], (N, C_out, H, W)).astype(x.dtype)


if __name__ == "__main__":
    key = jax.random.PRNGKey(0)
    k_x, k_w, k_g, k_b = jax.random.split(key, 4)

    N, C_in, C_out, H, W = 2, 4, 4, 16, 16

    x = jax.random.normal(k_x, (N, C_in, H, W), dtype=jnp.float32)
    conv_w = jax.random.normal(k_w, (C_out, C_in, 1, 1), dtype=jnp.float32) * 0.1
    bn_gamma = 1.0 + 0.1 * jax.random.normal(k_g, (C_out,), dtype=jnp.float32)
    bn_beta = 0.1 * jax.random.normal(k_b, (C_out,), dtype=jnp.float32)
    bn_mean = jnp.zeros((C_out,), dtype=jnp.float32)
    bn_var = jnp.ones((C_out,), dtype=jnp.float32)

    out = aspp_pooling_forward(x, conv_w, bn_gamma, bn_beta, bn_mean, bn_var)
    out = jax.block_until_ready(out)

    ref = _reference(x, conv_w, bn_gamma, bn_beta, bn_mean, bn_var)
    assert out.shape == (N, C_out, H, W)
    assert jnp.allclose(out, ref, atol=1e-5, rtol=1e-5)

    print("KERNEL_OK")
</pallas_src>

<mosaic_0001>
module attributes {stable_mosaic.version = 11 : i64} {
  func.func @_aspp_pooling_kernel(%arg0: i32, %arg1: memref<2x4x256xf32, #tpu.memory_space<vmem>>, %arg2: memref<4x4xf32, #tpu.memory_space<vmem>>, %arg3: memref<1x4xf32, #tpu.memory_space<vmem>>, %arg4: memref<1x4xf32, #tpu.memory_space<vmem>>, %arg5: memref<2x4xf32, #tpu.memory_space<vmem>>, %arg6: memref<2x4x256xf32, #tpu.memory_space<vmem>>) attributes {dimension_semantics = [#tpu.dimension_semantics<arbitrary>], iteration_bounds = array<i64: 1>, scalar_prefetch = 0 : i64, scratch_operands = 1 : i64, tpu.core_type = #tpu.core_type<tc>, window_params = [{transform_indices = @transform_0, window_bounds = array<i64: 2, 4, 256>}, {pipeline_mode = #tpu.pipeline_mode<synchronous>, transform_indices = @transform_1, window_bounds = array<i64: 4, 4>}, {pipeline_mode = #tpu.pipeline_mode<synchronous>, transform_indices = @transform_2, window_bounds = array<i64: 1, 4>}, {pipeline_mode = #tpu.pipeline_mode<synchronous>, transform_indices = @transform_3, window_bounds = array<i64: 1, 4>}, {pipeline_mode = #tpu.pipeline_mode<synchronous>, transform_indices = @transform_4, window_bounds = array<i64: 2, 4>}]} {
    %c0_i32 = arith.constant 0 : i32
    %0 = arith.cmpi eq, %arg0, %c0_i32 : i32
    %1 = arith.extui %0 : i1 to i32
    %c0_i32_0 = arith.constant 0 : i32
    %2 = arith.cmpi ne, %1, %c0_i32_0 : i32
    scf.if %2 {
      %cst = arith.constant 0.000000e+00 : f32
      %10 = vector.broadcast %cst : f32 to vector<2x4x256xf32>
      %c0_11 = arith.constant 0 : index
      %c0_12 = arith.constant 0 : index
      %c0_13 = arith.constant 0 : index
      %11 = vector.load %arg6[%c0_11, %c0_12, %c0_13] : memref<2x4x256xf32, #tpu.memory_space<vmem>>, vector<2x4x256xf32>
      tpu.vector_store %arg6[%c0_11, %c0_12, %c0_13], %10 {strides = array<i32>} : memref<2x4x256xf32, #tpu.memory_space<vmem>>, vector<2x4x256xf32>,
    } else {
    }
    %c0 = arith.constant 0 : index
    %c0_1 = arith.constant 0 : index
    %c0_2 = arith.constant 0 : index
    %3 = vector.load %arg6[%c0, %c0_1, %c0_2] : memref<2x4x256xf32, #tpu.memory_space<vmem>>, vector<2x4x256xf32>
    %c0_3 = arith.constant 0 : index
    %c0_4 = arith.constant 0 : index
    %c0_5 = arith.constant 0 : index
    %4 = vector.load %arg1[%c0_3, %c0_4, %c0_5] : memref<2x4x256xf32, #tpu.memory_space<vmem>>, vector<2x4x256xf32>
    %5 = arith.addf %3, %4 : vector<2x4x256xf32>
    %c0_6 = arith.constant 0 : index
    %c0_7 = arith.constant 0 : index
    %c0_8 = arith.constant 0 : index
    %6 = vector.load %arg6[%c0_6, %c0_7, %c0_8] : memref<2x4x256xf32, #tpu.memory_space<vmem>>, vector<2x4x256xf32>
    tpu.vector_store %arg6[%c0_6, %c0_7, %c0_8], %5 {strides = array<i32>} : memref<2x4x256xf32, #tpu.memory_space<vmem>>, vector<2x4x256xf32>,
    %c0_i32_9 = arith.constant 0 : i32
    %7 = arith.cmpi eq, %arg0, %c0_i32_9 : i32
    %8 = arith.extui %7 : i1 to i32
    %c0_i32_10 = arith.constant 0 : i32
    %9 = arith.cmpi ne, %8, %c0_i32_10 : i32
    scf.if %9 {
      %c0_11 = arith.constant 0 : index
      %c0_12 = arith.constant 0 : index
      %c0_13 = arith.constant 0 : index
      %10 = vector.load %arg6[%c0_11, %c0_12, %c0_13] : memref<2x4x256xf32, #tpu.memory_space<vmem>>, vector<2x4x256xf32>
      %cst = arith.constant dense<0.000000e+00> : vector<2x4xf32>
      %11 = vector.multi_reduction <add>, %10, %cst [2] : vector<2x4x256xf32> to vector<2x4xf32>
      %c0_14 = arith.constant 0 : index
      %c0_15 = arith.constant 0 : index
      %12 = vector.load %arg2[%c0_14, %c0_15] : memref<4x4xf32, #tpu.memory_space<vmem>>, vector<4x4xf32>
      %cst_16 = arith.constant dense<0.000000e+00> : vector<2x4xf32>
      %13 = tpu.matmul %11, %12, %cst_16 {dimension_numbers = #tpu.dot_dimension_numbers<[1], [0], [0], [1], [0, 0, 1, 1], [], []>} : vector<2x4xf32>, vector<4x4xf32>, vector<2x4xf32> -> vector<2x4xf32>
      %c0_17 = arith.constant 0 : index
      %c0_18 = arith.constant 0 : index
      %14 = vector.load %arg3[%c0_17, %c0_18] : memref<1x4xf32, #tpu.memory_space<vmem>>, vector<1x4xf32>
      %15 = vector.broadcast %14 : vector<1x4xf32> to vector<2x4xf32>
      %16 = arith.mulf %13, %15 : vector<2x4xf32>
      %c0_19 = arith.constant 0 : index
      %c0_20 = arith.constant 0 : index
      %17 = vector.load %arg4[%c0_19, %c0_20] : memref<1x4xf32, #tpu.memory_space<vmem>>, vector<1x4xf32>
      %18 = vector.broadcast %17 : vector<1x4xf32> to vector<2x4xf32>
      %19 = arith.addf %16, %18 : vector<2x4xf32>
      %cst_21 = arith.constant 0.000000e+00 : f32
      %20 = vector.broadcast %cst_21 : f32 to vector<2x4xf32>
      %21 = arith.maximumf %19, %20 : vector<2x4xf32>
      %c0_22 = arith.constant 0 : index
      %c0_23 = arith.constant 0 : index
      %22 = vector.load %arg5[%c0_22, %c0_23] : memref<2x4xf32, #tpu.memory_space<vmem>>, vector<2x4xf32>
      tpu.vector_store %arg5[%c0_22, %c0_23], %21 {strides = array<i32>} : memref<2x4xf32, #tpu.memory_space<vmem>>, vector<2x4xf32>,
    } else {
    }
    return
  }
  func.func @transform_0(%arg0: i32) -> (i32, i32, i32) {
    %c0_i32 = arith.constant 0 : i32
    %c0_i32_0 = arith.constant 0 : i32
    %c0_i32_1 = arith.constant 0 : i32
    return %c0_i32, %c0_i32_0, %arg0 : i32, i32, i32
  }
  func.func @transform_1(%arg0: i32) -> (i32, i32) {
    %c0_i32 = arith.constant 0 : i32
    %c0_i32_0 = arith.constant 0 : i32
    %c0_i32_1 = arith.constant 0 : i32
    return %c0_i32, %c0_i32_0 : i32, i32
  }
  func.func @transform_2(%arg0: i32) -> (i32, i32) {
    %c0_i32 = arith.constant 0 : i32
    %c0_i32_0 = arith.constant 0 : i32
    %c0_i32_1 = arith.constant 0 : i32
    return %c0_i32, %c0_i32_0 : i32, i32
  }
  func.func @transform_3(%arg0: i32) -> (i32, i32) {
    %c0_i32 = arith.constant 0 : i32
    %c0_i32_0 = arith.constant 0 : i32
    %c0_i32_1 = arith.constant 0 : i32
    return %c0_i32, %c0_i32_0 : i32, i32
  }
  func.func @transform_4(%arg0: i32) -> (i32, i32) {
    %c0_i32 = arith.constant 0 : i32
    %c0_i32_0 = arith.constant 0 : i32
    %c0_i32_1 = arith.constant 0 : i32
    return %c0_i32, %c0_i32_0 : i32, i32
  }
}

</mosaic_0001>

<llo_original>
// kernel: tpu_custom_call.1
$region0: #{tpu_custom_call.1}
  #allocation0 [shape = 'u32[]', space=smem, size = 0x4, offset = 0x4, fixed_abs, tag = 'smem constant byte address 0x4 - core index']
  #allocation1 [shape = 'u32[144,128]{1,0:T(1,128)}', space=vmem, size = 0x12000, scoped, tag = 'internal scratch']
  #allocation2 [shape = 'f32[2,4,256]{2,1,0:T(4,128)}', space=vmem, size = 0x2000, scoped, tag = 'scratch operand']
  %s0 = inlined_call_operand.hbm [shape: f32[2,4,256], index: 0, kind: input, shape index: {}]
  %s1 = inlined_call_operand.hbm [shape: f32[4,4], index: 1, kind: input, shape index: {}]
  %s2 = inlined_call_operand.vmem [shape: f32[1,4], index: 2, kind: input, shape index: {}]
  %s3 = inlined_call_operand.vmem [shape: f32[1,4], index: 3, kind: input, shape index: {}]
  %s4 = inlined_call_operand.hbm [shape: f32[2,4], index: 4, kind: output, shape index: {}]
  %s5 = sld [smem:[#allocation0]]
  $region42: #{tpu_custom_call.1} parent=0
    _
  %s7 = ssub.s32 1, %s5
  %s8 = scalar_select 0, %s7, %s5
  $region1: #{tpu_custom_call.1} parent=0
    #allocation3 [shape = 'u8[8192]{0}', space=vmem, size = 0x2000, scoped, tag = 'input window, operand 0, single buffered']
    #allocation4 [shape = 's32[1]{0}', space=sflag, size = 0x4, scoped, tag = 'scoped memory for tpu_custom_call.1']
    #allocation5 [shape = 's32[1]{0}', space=sflag, size = 0x4, scoped, tag = 'scoped memory for tpu_custom_call.1']
    #allocation6 [shape = 'u8[2048]{0}', space=vmem, size = 0x800, scoped, tag = 'input window, operand 1, single buffered']
    #allocation7 [shape = 's32[1]{0}', space=sflag, size = 0x4, scoped, tag = 'scoped memory for tpu_custom_call.1']
    #allocation8 [shape = 'u8[1024]{0}', space=vmem, size = 0x400, scoped, tag = 'output window, operand 0, single buffered']
    %9 = vsyncpa [#allocation4], 0
    %10 = vsyncpa [#allocation7], 0
    %11 = vsyncpa [#allocation5], 0
    // Predicated region
    $region2: #{tpu_custom_call.1} parent=1 // pred_check
      _
    $region3: #{tpu_custom_call.1} parent=1 // pred_check_branch
      %13 = sbr.rel (0) target = $region5
    $region4: #{tpu_custom_call.1} parent=1 // pred_region
      %s15 = ssub.s32 256, 256
      %16 = vsyncadd [#allocation4], %s15
      %s17 = sshll.u32 [#allocation3], 4
      %s18 = int_to_ptr.vmem [resolvable:$true] %s17
      %23 = dma.hbm_to_vmem [thread:$0]  %s0, 256, %s18, [#allocation4], 128, 128, 8
    $region5: #{tpu_custom_call.1} parent=1 // pred_fallthru
      _
    // Predicated region
    $region6: #{tpu_custom_call.1} parent=1 // pred_check
      _
    $region7: #{tpu_custom_call.1} parent=1 // pred_check_branch
      %25 = sbr.rel (0) target = $region9
    $region8: #{tpu_custom_call.1} parent=1 // pred_region
      %s27 = ssub.s32 64, 64
      %28 = vsyncadd [#allocation7], %s27
      %s30 = sshll.u32 [#allocation6], 4
      %s31 = int_to_ptr.vmem [resolvable:$true] %s30
      %33 = dma.hbm_to_vmem [thread:$0]  %s1, 64, %s31, [#allocation7]
    $region9: #{tpu_custom_call.1} parent=1 // pred_fallthru
      _
    // Predicated region
    $region10: #{tpu_custom_call.1} parent=1 // pred_check
      _
    $region11: #{tpu_custom_call.1} parent=1 // pred_check_branch
      %35 = sbr.rel (0) target = $region13
    $region12: #{tpu_custom_call.1} parent=1 // pred_region
      _
    $region13: #{tpu_custom_call.1} parent=1 // pred_fallthru
      _
    // Predicated region
    $region14: #{tpu_custom_call.1} parent=1 // pred_check
      _
    $region15: #{tpu_custom_call.1} parent=1 // pred_check_branch
      %37 = sbr.rel (0) target = $region17
    $region16: #{tpu_custom_call.1} parent=1 // pred_region
      _
    $region17: #{tpu_custom_call.1} parent=1 // pred_fallthru
      _
    // Predicated region
    $region18: #{tpu_custom_call.1} parent=1 // pred_check
      _
    $region19: #{tpu_custom_call.1} parent=1 // pred_check_branch
      %39 = sbr.rel (0) target = $region21
    $region20: #{tpu_custom_call.1} parent=1 // pred_region
      %40 = dma.done [#allocation4], 256
    $region21: #{tpu_custom_call.1} parent=1 // pred_fallthru
      _
    // Predicated region
    $region22: #{tpu_custom_call.1} parent=1 // pred_check
      _
    $region23: #{tpu_custom_call.1} parent=1 // pred_check_branch
      %42 = sbr.rel (0) target = $region25
    $region24: #{tpu_custom_call.1} parent=1 // pred_region
      %43 = dma.done [#allocation7], 64
    $region25: #{tpu_custom_call.1} parent=1 // pred_fallthru
      _
    %p44 = scmp.eq.s32.totalorder 0, 0
    // Predicated region
    $region26: #{tpu_custom_call.1} parent=1 // pred_check
      %p45 = pneg %p44
    $region27: #{tpu_custom_call.1} parent=1 // pred_check_branch
      %47 = sbr.rel (%p45) target = $region29
    $region28: #{tpu_custom_call.1} parent=1 // pred_region
      %48 = vst [vmem:[#allocation2] sm:$0xff] 0.0
      %49 = vst [vmem:[#allocation2 + $0x8] sm:$0xff] 0.0
    $region29: #{tpu_custom_call.1} parent=1 // pred_fallthru
      _
    %v50 = vld [vmem:[#allocation2] sm:$0xff]
    %v51 = vld [vmem:[#allocation2 + $0x8] sm:$0xff]
    %v52 = vld [vmem:[#allocation3] sm:$0xff]
    %v53 = vld [vmem:[#allocation3 + $0x8] sm:$0xff]
    %v54 = vadd.f32 %v50, %v52
    %v55 = vadd.f32 %v51, %v53
    %56 = vst [vmem:[#allocation2] sm:$0xff] %v54
    %57 = vst [vmem:[#allocation2 + $0x8] sm:$0xff] %v55
    // Predicated region
    $region30: #{tpu_custom_call.1} parent=1 // pred_check
      %p58 = pneg %p44
    $region31: #{tpu_custom_call.1} parent=1 // pred_check_branch
      %60 = sbr.rel (%p58) target = $region33
    $region32: #{tpu_custom_call.1} parent=1 // pred_region
      %v61 = vld [vmem:[#allocation2] sm:$0xff]
      %v62 = vld [vmem:[#allocation2 + $0x8] sm:$0xff]
      %v65 = vcombine.high %v61, %v61
      %v66 = vcombine.high %v62, %v62
      %vm69 = vcmask 1043456
      %v70 = vsel %vm69, %v61, 0.0
      %v71 = vsel %vm69, %v65, 0.0
      %v72 = vadd.f32 %v70, %v71
      %73 = vadd.xlane.f32.xlu0 %v72
      %v74 = vpop.xlane.xlu0 %73
      %v75 = vsel %vm69, %v62, 0.0
      %v76 = vsel %vm69, %v66, 0.0
      %v77 = vadd.f32 %v75, %v76
      %78 = vadd.xlane.f32.xlu0 %v77
      %v79 = vpop.xlane.xlu0 %78
      %v80 = vld [vmem:[#allocation6] sm:$0xf]
      %v83 = vlaneseq
      %v84 = vand.u32 %v83, 127
      %v85 = vlaneseq
      %v86 = vshrl.u32 %v85, 7
      %v87 = vsub.s32 %v84, %v86
      %v88 = vrot.slane %v74, %v87
      %v89 = vlaneseq
      %v90 = vshrl.u32 %v89, 7
      %v91 = vsub.s32 %v84, %v90
      %v92 = vrot.slane %v79, %v91
      %vm93 = vcmask 1041409
      %v94 = vsel %vm93, %v92, %v88
      %vm95 = vcmask 31744
      %v96 = vsel %vm95, %v94, 0
      %v99 = vsel %vm69, %v80, 0
      %101 = vmatprep.subr.mxu0 0.0
      %102 = vmatpush1.msra.mxu0 %v99
      %103 = vmatprep.subr.mxu0 0.0
      %104 = vmatpush1.msra.mxu0 0.0
      %105 = vmatprep.subr.mxu0 0.0
      %106 = vmatpush1.msra.mxu0 0.0
      %107 = vmatprep.subr.mxu0 0.0
      %108 = vmatpush1.msra.mxu0 0.0
      %109 = vmatprep.subr.mxu0 0.0
      %110 = vmatpush1.msra.mxu0 0.0
      %111 = vmatprep.subr.mxu0 0.0
      %112 = vmatpush1.msra.mxu0 0.0
      %113 = vmatprep.subr.mxu0 0.0
      %114 = vmatpush1.msra.mxu0 0.0
      %115 = vmatprep.subr.mxu0 0.0
      %116 = vmatpush1.msra.mxu0 0.0
      %117 = vmatprep.subr.mxu0 0.0
      %118 = vmatpush1.msra.mxu0 0.0
      %119 = vmatprep.subr.mxu0 0.0
      %120 = vmatpush1.msra.mxu0 0.0
      %121 = vmatprep.subr.mxu0 0.0
      %122 = vmatpush1.msra.mxu0 0.0
      %123 = vmatprep.subr.mxu0 0.0
      %124 = vmatpush1.msra.mxu0 0.0
      %125 = vmatprep.subr.mxu0 0.0
      %126 = vmatpush1.msra.mxu0 0.0
      %127 = vmatprep.subr.mxu0 0.0
      %128 = vmatpush1.msra.mxu0 0.0
      %129 = vmatprep.subr.mxu0 0.0
      %130 = vmatpush1.msra.mxu0 0.0
      %131 = vmatprep.subr.mxu0 0.0
      %132 = vmatpush1.msra.mxu0 0.0
      %133 = vmatprep.subr.mxu0 0.0
      %134 = vmatpush1.msra.mxu0 0.0
      %135 = vmatprep.subr.mxu0 0.0
      %136 = vmatpush1.msra.mxu0 0.0
      %137 = vmatprep.subr.mxu0 0.0
      %138 = vmatpush1.msra.mxu0 0.0
      %139 = vmatprep.subr.mxu0 0.0
      %140 = vmatpush1.msra.mxu0 0.0
      %141 = vmatprep.subr.mxu0 0.0
      %142 = vmatpush1.msra.mxu0 0.0
      %143 = vmatprep.subr.mxu0 0.0
      %144 = vmatpush1.msra.mxu0 0.0
      %145 = vmatprep.subr.mxu0 0.0
      %146 = vmatpush1.msra.mxu0 0.0
      %147 = vmatprep.subr.mxu0 0.0
      %148 = vmatpush1.msra.mxu0 0.0
      %149 = vmatprep.subr.mxu0 0.0
      %150 = vmatpush1.msra.mxu0 0.0
      %151 = vmatprep.subr.mxu0 0.0
      %152 = vmatpush1.msra.mxu0 0.0
      %153 = vmatprep.subr.mxu0 0.0
      %154 = vmatpush1.msra.mxu0 0.0
      %155 = vmatprep.subr.mxu0 0.0
      %156 = vmatpush1.msra.mxu0 0.0
      %157 = vmatprep.subr.mxu0 0.0
      %158 = vmatpush1.msra.mxu0 0.0
      %159 = vmatprep.subr.mxu0 0.0
      %160 = vmatpush1.msra.mxu0 0.0
      %161 = vmatprep.subr.mxu0 0.0
      %162 = vmatpush1.msra.mxu0 0.0
      %163 = vmatprep.subr.mxu0 0.0
      %164 = vmatpush1.msra.mxu0 0.0
      %165 = vmatprep.mubr.f32.mxu0 0.0
      %166 = vmatmul.mubr.f32.gmra.mrb[0].mxu0 %v96
      %v167 = vpop.f32.mrb[0].mxu0
      %v168 = vadd.f32 0.0, %v167
      %v169 = vpop.f32.mrb[0].mxu0
      %170 = vdwg.mxu0
      %v171 = vld [vmem:[%s2] sm:$0x1]
      %v173 = vlaneseq
      %v174 = vshrl.u32 %v173, 7
      %v175 = vsub.s32 0, %v174
      %v176 = vrot.slane %v171, %v175
      %v178 = vmul.f32 %v168, %v176
      %v179 = vld [vmem:[%s3] sm:$0x1]
      %v181 = vlaneseq
      %v182 = vshrl.u32 %v181, 7
      %v183 = vsub.s32 0, %v182
      %v184 = vrot.slane %v179, %v183
      %v186 = vadd.f32 %v178, %v184
      %v187 = vmax.f32 %v186, 0.0
      %vm188 = vcmask 25600
      %189 = vst.msk [vmem:[#allocation8] sm:$0x3] %vm188, %v187
    $region33: #{tpu_custom_call.1} parent=1 // pred_fallthru
      _
    // Predicated region
    $region34: #{tpu_custom_call.1} parent=1 // pred_check
      _
    $region35: #{tpu_custom_call.1} parent=1 // pred_check_branch
      %191 = sbr.rel (0) target = $region37
    $region36: #{tpu_custom_call.1} parent=1 // pred_region
      %s193 = ssub.s32 32, 32
      %194 = vsyncadd [#allocation5], %s193
      %s196 = sshll.u32 [#allocation8], 4
      %s197 = int_to_ptr.vmem [resolvable:$true] %s196
      %199 = dma.vmem_to_hbm [thread:$0]  %s197, 32, %s4, [#allocation5]
    $region37: #{tpu_custom_call.1} parent=1 // pred_fallthru
      _
    // Predicated region
    $region38: #{tpu_custom_call.1} parent=1 // pred_check
      _
    $region39: #{tpu_custom_call.1} parent=1 // pred_check_branch
      %201 = sbr.rel (0) target = $region41
    $region40: #{tpu_custom_call.1} parent=1 // pred_region
      %202 = dma.done [#allocation5], 32
    $region41: #{tpu_custom_call.1} parent=1 // pred_fallthru
      _
    %203 = vsyncpa [#allocation4], 1
    %204 = vsyncpa [#allocation7], 1
    %205 = vsyncpa [#allocation5], 1

</llo_original>
